<compile_context>
chip_gen: v7x
topology: tpu7x:2x2x1
jax: 0.10.0
libtpu: 0.0.40
codegen_flags: <defaults>
</compile_context>

<pallas_src>
import functools

import jax
import jax.numpy as jnp
from jax import lax
from jax.experimental import pallas as pl
from jax.experimental.pallas import tpu as pltpu


# ---------------------------------------------------------------------------
# Helpers
# ---------------------------------------------------------------------------
def _round_up(x: int, q: int) -> int:
    return ((x + q - 1) // q) * q


def _vmem_limit_bytes() -> int:
    """Per-generation VMEM limit (v5e/v6e: ~96 MiB, v7x: ~48 MiB)."""
    try:
        cap = int(pltpu.get_tpu_info().vmem_capacity_bytes)
    except Exception:  # query unavailable -> assume smallest (v7x: 64 MiB/TC)
        cap = 64 * 1024 * 1024
    return int(min(max(cap * 3 // 4, 32 * 1024 * 1024), 96 * 1024 * 1024))


def _pick_batch_block(B: int, s_tile: int, H: int, itemsize: int,
                      budget_bytes: int = 2 * 1024 * 1024) -> int:
    """Largest divisor of B whose (Bb, s_tile, H) block stays under budget."""
    per_b = max(1, s_tile * H * itemsize)
    max_bb = max(1, budget_bytes // per_b)
    bb = 1
    for d in range(1, B + 1):
        if B % d == 0 and d <= max_bb:
            bb = d
    return bb


# ---------------------------------------------------------------------------
# Phase 1: batch mean  (B, S, H) -> (S_pad, H_pad), padded rows/lanes are zero
# ---------------------------------------------------------------------------
def _batch_mean_kernel(x_ref, out_ref, acc_ref, *, B, S, H, s_tile, inv_b):
    si = pl.program_id(0)
    bi = pl.program_id(1)
    nb = pl.num_programs(1)

    x = x_ref[...].astype(jnp.float32)        # (Bb, s_tile, H)
    part = jnp.sum(x, axis=0)                 # (s_tile, H)

    @pl.when(bi == 0)
    def _init():
        acc_ref[...] = part

    @pl.when(bi > 0)
    def _acc():
        acc_ref[...] += part

    @pl.when(bi == nb - 1)
    def _store():
        res = acc_ref[...] * jnp.float32(inv_b)          # fold 1/B here
        if S % s_tile != 0:
            # mask rows past the true sequence length (partial edge block reads
            # garbage from HBM; `where` is a select so NaN/Inf cannot leak).
            rows = si * s_tile + lax.broadcasted_iota(jnp.int32, (s_tile, H), 0)
            res = jnp.where(rows < S, res, 0.0)
        h_pad = out_ref.shape[-1]
        if H == h_pad:
            out_ref[...] = res.astype(out_ref.dtype)
        else:
            # lane-pad to a multiple of 128 with zeros (zero columns do not
            # change the gram).
            out_ref[...] = jnp.zeros(out_ref.shape, out_ref.dtype)
            out_ref[:, :H] = res.astype(out_ref.dtype)


def _batch_mean(x, *, s_tile, S_pad, H_pad, out_dtype, vmem_limit):
    B, S, H = x.shape
    num_s = S_pad // s_tile
    Bb = _pick_batch_block(B, s_tile, H, x.dtype.itemsize)
    nb = B // Bb
    kernel = functools.partial(_batch_mean_kernel, B=B, S=S, H=H,
                               s_tile=s_tile, inv_b=1.0 / B)
    return pl.pallas_call(
        kernel,
        out_shape=jax.ShapeDtypeStruct((S_pad, H_pad), out_dtype),
        grid=(num_s, nb),
        in_specs=[pl.BlockSpec((Bb, s_tile, H), lambda si, bi: (bi, si, 0))],
        out_specs=pl.BlockSpec((s_tile, H_pad), lambda si, bi: (si, 0)),
        scratch_shapes=[pltpu.VMEM((s_tile, H), jnp.float32)],
        compiler_params=pltpu.CompilerParams(
            dimension_semantics=("parallel", "arbitrary"),
            vmem_limit_bytes=vmem_limit),
    )(x)


# ---------------------------------------------------------------------------
# Phase 2: packed upper-triangle gram tiles + L1 partial sums
# ---------------------------------------------------------------------------
def _gram_l1_kernel(i_idx_ref, j_idx_ref, s_i_ref, s_j_ref, t_i_ref, t_j_ref,
                    out_ref, *, gram_dtype):
    t = pl.program_id(0)
    i = i_idx_ref[t]
    j = j_idx_ref[t]

    # Contract H on both operands (A @ B.T form, MXU transposed-RHS path):
    dn = (((1,), (1,)), ((), ()))
    s_gram = lax.dot_general(s_i_ref[...].astype(gram_dtype),
                             s_j_ref[...].astype(gram_dtype),
                             dn, preferred_element_type=jnp.float32)
    t_gram = lax.dot_general(t_i_ref[...].astype(gram_dtype),
                             t_j_ref[...].astype(gram_dtype),
                             dn, preferred_element_type=jnp.float32)
    partial = jnp.sum(jnp.abs(s_gram - t_gram))
    # Gram symmetry: off-diagonal tiles stand in for their mirror image.
    weight = jnp.where(i == j, jnp.float32(1.0), jnp.float32(2.0))
    out_ref[...] = jnp.broadcast_to((weight * partial).astype(jnp.float32),
                                    out_ref.shape)


def _gram_l1_partials(s_mean, t_mean, *, s_tile, gram_dtype, vmem_limit):
    S_pad, Hs_pad = s_mean.shape
    _, Ht_pad = t_mean.shape
    num_s = S_pad // s_tile

    # Packed upper triangle, i-major so consecutive steps reuse the i-strips.
    i_list, j_list = [], []
    for i in range(num_s):
        for j in range(i, num_s):
            i_list.append(i)
            j_list.append(j)
    T = len(i_list)
    i_idx = jnp.array(i_list, dtype=jnp.int32)
    j_idx = jnp.array(j_list, dtype=jnp.int32)

    grid_spec = pltpu.PrefetchScalarGridSpec(
        num_scalar_prefetch=2,
        grid=(T,),
        in_specs=[
            pl.BlockSpec((s_tile, Hs_pad), lambda t, ii, jj: (ii[t], 0)),  # S rows
            pl.BlockSpec((s_tile, Hs_pad), lambda t, ii, jj: (jj[t], 0)),  # S cols
            pl.BlockSpec((s_tile, Ht_pad), lambda t, ii, jj: (ii[t], 0)),  # T rows
            pl.BlockSpec((s_tile, Ht_pad), lambda t, ii, jj: (jj[t], 0)),  # T cols
        ],
        out_specs=pl.BlockSpec((1, 8, 128), lambda t, ii, jj: (t, 0, 0)),
    )
    return pl.pallas_call(
        functools.partial(_gram_l1_kernel, gram_dtype=gram_dtype),
        out_shape=jax.ShapeDtypeStruct((T, 8, 128), jnp.float32),
        grid_spec=grid_spec,
        compiler_params=pltpu.CompilerParams(
            dimension_semantics=("parallel",),
            vmem_limit_bytes=vmem_limit),
    )(i_idx, j_idx, s_mean, s_mean, t_mean, t_mean)


# ---------------------------------------------------------------------------
# Wrapper
# ---------------------------------------------------------------------------
def kd_lstm_layer_loss(ce_loss, alpha, teacher_layer, student_layer, *,
                       gram_dtype=jnp.bfloat16):
    """Pallas implementation of KDLSTMLayerLoss.forward.

    ce_loss: scalar; alpha: python float / scalar; teacher_layer (Bt, S, Ht) and
    student_layer (Bs, S, Hs).  Returns an f32 scalar.
    gram_dtype: MXU input dtype for the grams (bf16 default for v6e/v7x peak
    throughput; use jnp.float32 for tighter numerics — bf16 typically shifts the
    final loss by ~0.1% at these scales).
    """
    teacher_layer = jnp.asarray(teacher_layer)
    student_layer = jnp.asarray(student_layer)
    assert teacher_layer.ndim == 3 and student_layer.ndim == 3
    _, St, Ht = teacher_layer.shape
    _, Ss, Hs = student_layer.shape
    assert St == Ss, "teacher/student sequence lengths must match"
    S = St

    vmem_limit = _vmem_limit_bytes()
    sum_dtype = jnp.dtype(gram_dtype)
    Hs_pad = _round_up(Hs, 128)
    Ht_pad = _round_up(Ht, 128)

    # MXU-friendly row tile (<=256, multiple of 8); shrink only if the phase-2
    # full-H strips (double-buffered) would not fit the (v7x-safe) VMEM budget.
    s_tile = min(256, _round_up(S, 8))
    strip_budget = min(vmem_limit // 2, 24 * 1024 * 1024)

    def _strips_bytes(st):
        return 2 * 2 * st * (Hs_pad + Ht_pad) * sum_dtype.itemsize

    while s_tile > 8 and _strips_bytes(s_tile) > strip_budget:
        s_tile = max(8, ((s_tile // 2) + 7) // 8 * 8)

    num_s = pl.cdiv(S, s_tile)
    S_pad = num_s * s_tile

    # Phase 1: batch means (padded rows / lanes zeroed -> they contribute 0 to
    # the gram and 0 to the L1 sum, so only the final 1/S^2 needs the true S).
    s_mean = _batch_mean(student_layer, s_tile=s_tile, S_pad=S_pad, H_pad=Hs_pad,
                         out_dtype=sum_dtype, vmem_limit=vmem_limit)
    t_mean = _batch_mean(teacher_layer, s_tile=s_tile, S_pad=S_pad, H_pad=Ht_pad,
                         out_dtype=sum_dtype, vmem_limit=vmem_limit)

    # Phase 2: packed upper-triangle gram tiles + per-tile L1 partial sums.
    partials = _gram_l1_partials(s_mean, t_mean, s_tile=s_tile,
                                 gram_dtype=gram_dtype, vmem_limit=vmem_limit)

    l1_sum = jnp.sum(partials[:, 0, 0])
    l_loss = l1_sum / jnp.float32(S * S)
    a = jnp.asarray(alpha, jnp.float32)
    ce = jnp.asarray(ce_loss, jnp.float32)
    return a * ce + (1.0 - a) * l_loss


# ---------------------------------------------------------------------------
# Pure-JAX reference (high-precision matmuls)
# ---------------------------------------------------------------------------
def _reference(ce_loss, alpha, teacher_layer, student_layer):
    hp = lax.Precision.HIGHEST
    t_mean = jnp.mean(teacher_layer.astype(jnp.float32), axis=0)
    s_mean = jnp.mean(student_layer.astype(jnp.float32), axis=0)
    s_gram = jnp.matmul(s_mean, s_mean.T, precision=hp)
    t_gram = jnp.matmul(t_mean, t_mean.T, precision=hp)
    l_loss = jnp.mean(jnp.abs(s_gram - t_gram))
    a = jnp.float32(alpha)
    return a * jnp.float32(ce_loss) + (1.0 - a) * l_loss


if __name__ == "__main__":
    key = jax.random.PRNGKey(0)
    k1, k2, k3, k4, k5 = jax.random.split(key, 5)

    # ---- small shapes: single tile, lane-padding path (H % 128 != 0) --------
    B, S = 2, 8
    teacher = jax.random.normal(k1, (B, S, 32), dtype=jnp.float32)
    student = jax.random.normal(k2, (B, S, 48), dtype=jnp.float32)
    ce_loss = jax.random.uniform(k3, (), dtype=jnp.float32)
    alpha = 0.7

    ref = _reference(ce_loss, alpha, teacher, student)
    out_bf16 = jax.block_until_ready(
        kd_lstm_layer_loss(ce_loss, alpha, teacher, student))
    assert jnp.allclose(out_bf16, ref, rtol=2e-2, atol=2e-2), (out_bf16, ref)
    out_f32 = jax.block_until_ready(
        kd_lstm_layer_loss(ce_loss, alpha, teacher, student,
                           gram_dtype=jnp.float32))
    assert jnp.allclose(out_f32, ref, rtol=5e-3, atol=5e-3), (out_f32, ref)

    # ---- larger shapes: packed-triangle grid, edge-masked rows (384 % 256),
    # ---- different teacher/student hidden sizes, batch-blocked phase 1 ------
    B2, S2 = 6, 384
    teacher2 = jax.random.normal(k4, (B2, S2, 640), dtype=jnp.float32)
    student2 = jax.random.normal(k5, (B2, S2, 512), dtype=jnp.float32)
    ref2 = _reference(ce_loss, alpha, teacher2, student2)
    out2_bf16 = jax.block_until_ready(
        kd_lstm_layer_loss(ce_loss, alpha, teacher2, student2))
    assert jnp.allclose(out2_bf16, ref2, rtol=2e-2, atol=2e-2), (out2_bf16, ref2)
    out2_f32 = jax.block_until_ready(
        kd_lstm_layer_loss(ce_loss, alpha, teacher2, student2,
                           gram_dtype=jnp.float32))
    assert jnp.allclose(out2_f32, ref2, rtol=5e-3, atol=5e-3), (out2_f32, ref2)

    print("KERNEL_OK")
</pallas_src>

<mosaic_0001>
module attributes {stable_mosaic.version = 11 : i64} {
  func.func @_batch_mean_kernel(%arg0: i32, %arg1: i32, %arg2: memref<2x8x48xf32, #tpu.memory_space<vmem>>, %arg3: memref<8x128xbf16, #tpu.memory_space<vmem>>, %arg4: memref<8x48xf32, #tpu.memory_space<vmem>>) attributes {dimension_semantics = [#tpu.dimension_semantics<parallel>, #tpu.dimension_semantics<arbitrary>], iteration_bounds = array<i64: 1, 1>, scalar_prefetch = 0 : i64, scratch_operands = 1 : i64, tpu.core_type = #tpu.core_type<tc>, window_params = [{transform_indices = @transform_0, window_bounds = array<i64: 2, 8, 48>}, {transform_indices = @transform_1, window_bounds = array<i64: 8, 128>}]} {
    %c0 = arith.constant 0 : index
    %c0_0 = arith.constant 0 : index
    %c0_1 = arith.constant 0 : index
    %0 = vector.load %arg2[%c0, %c0_0, %c0_1] : memref<2x8x48xf32, #tpu.memory_space<vmem>>, vector<2x8x48xf32>
    %cst = arith.constant dense<0.000000e+00> : vector<8x48xf32>
    %1 = vector.multi_reduction <add>, %0, %cst [0] : vector<2x8x48xf32> to vector<8x48xf32>
    %c0_i32 = arith.constant 0 : i32
    %2 = arith.cmpi eq, %arg1, %c0_i32 : i32
    %3 = arith.extui %2 : i1 to i32
    %c0_i32_2 = arith.constant 0 : i32
    %4 = arith.cmpi ne, %3, %c0_i32_2 : i32
    scf.if %4 {
      %c0_7 = arith.constant 0 : index
      %c0_8 = arith.constant 0 : index
      %11 = vector.load %arg4[%c0_7, %c0_8] : memref<8x48xf32, #tpu.memory_space<vmem>>, vector<8x48xf32>
      tpu.vector_store %arg4[%c0_7, %c0_8], %1 {strides = array<i32>} : memref<8x48xf32, #tpu.memory_space<vmem>>, vector<8x48xf32>,
    } else {
    }
    %c0_i32_3 = arith.constant 0 : i32
    %5 = arith.cmpi sgt, %arg1, %c0_i32_3 : i32
    %6 = arith.extui %5 : i1 to i32
    %c0_i32_4 = arith.constant 0 : i32
    %7 = arith.cmpi ne, %6, %c0_i32_4 : i32
    scf.if %7 {
      %c0_7 = arith.constant 0 : index
      %c0_8 = arith.constant 0 : index
      %11 = vector.load %arg4[%c0_7, %c0_8] : memref<8x48xf32, #tpu.memory_space<vmem>>, vector<8x48xf32>
      %12 = arith.addf %11, %1 : vector<8x48xf32>
      %c0_9 = arith.constant 0 : index
      %c0_10 = arith.constant 0 : index
      %13 = vector.load %arg4[%c0_9, %c0_10] : memref<8x48xf32, #tpu.memory_space<vmem>>, vector<8x48xf32>
      tpu.vector_store %arg4[%c0_9, %c0_10], %12 {strides = array<i32>} : memref<8x48xf32, #tpu.memory_space<vmem>>, vector<8x48xf32>,
    } else {
    }
    %c0_i32_5 = arith.constant 0 : i32
    %8 = arith.cmpi eq, %arg1, %c0_i32_5 : i32
    %9 = arith.extui %8 : i1 to i32
    %c0_i32_6 = arith.constant 0 : i32
    %10 = arith.cmpi ne, %9, %c0_i32_6 : i32
    scf.if %10 {
      %c0_7 = arith.constant 0 : index
      %c0_8 = arith.constant 0 : index
      %11 = vector.load %arg4[%c0_7, %c0_8] : memref<8x48xf32, #tpu.memory_space<vmem>>, vector<8x48xf32>
      %cst_9 = arith.constant 5.000000e-01 : f32
      %12 = vector.broadcast %cst_9 : f32 to vector<8x48xf32>
      %13 = arith.mulf %11, %12 : vector<8x48xf32>
      %cst_10 = arith.constant 0.000000e+00 : bf16
      %14 = vector.broadcast %cst_10 : bf16 to vector<8x128xbf16>
      %c0_11 = arith.constant 0 : index
      %c0_12 = arith.constant 0 : index
      %15 = vector.load %arg3[%c0_11, %c0_12] : memref<8x128xbf16, #tpu.memory_space<vmem>>, vector<8x128xbf16>
      tpu.vector_store %arg3[%c0_11, %c0_12], %14 {strides = array<i32>} : memref<8x128xbf16, #tpu.memory_space<vmem>>, vector<8x128xbf16>,
      %16 = arith.truncf %13 : vector<8x48xf32> to vector<8x48xbf16>
      %c0_13 = arith.constant 0 : index
      %c0_14 = arith.constant 0 : index
      %17 = vector.load %arg3[%c0_13, %c0_14] : memref<8x128xbf16, #tpu.memory_space<vmem>>, vector<8x48xbf16>
      tpu.vector_store %arg3[%c0_13, %c0_14], %16 {strides = array<i32>} : memref<8x128xbf16, #tpu.memory_space<vmem>>, vector<8x48xbf16>,
    } else {
    }
    return
  }
  func.func @transform_0(%arg0: i32, %arg1: i32) -> (i32, i32, i32) {
    %c0_i32 = arith.constant 0 : i32
    %c0_i32_0 = arith.constant 0 : i32
    return %arg1, %arg0, %c0_i32 : i32, i32, i32
  }
  func.func @transform_1(%arg0: i32, %arg1: i32) -> (i32, i32) {
    %c0_i32 = arith.constant 0 : i32
    %c0_i32_0 = arith.constant 0 : i32
    return %arg0, %c0_i32 : i32, i32
  }
}

</mosaic_0001>

<llo_original>
// kernel: tpu_custom_call.1
$region0: #{tpu_custom_call.1}
  #allocation0 [shape = 'u32[]', space=smem, size = 0x4, offset = 0x4, fixed_abs, tag = 'smem constant byte address 0x4 - core index']
  #allocation1 [shape = 'u32[144,128]{1,0:T(1,128)}', space=vmem, size = 0x12000, scoped, tag = 'internal scratch']
  #allocation2 [shape = 'f32[8,48]{1,0:T(8,128)}', space=vmem, size = 0x1000, scoped, tag = 'scratch operand']
  %s0 = inlined_call_operand.hbm [shape: f32[2,8,48], index: 0, kind: input, shape index: {}]
  %s1 = inlined_call_operand.hbm [shape: bf16[8,128], index: 1, kind: output, shape index: {}]
  %s2 = sld [smem:[#allocation0]]
  $region30: #{tpu_custom_call.1} parent=0
    _
  %s4 = ssub.s32 1, %s2
  %s5 = scalar_select 0, %s4, %s2
  $region1: #{tpu_custom_call.1} parent=0
    #allocation3 [shape = 'u8[8192]{0}', space=vmem, size = 0x2000, scoped, tag = 'input window, operand 0, single buffered']
    #allocation4 [shape = 's32[1]{0}', space=sflag, size = 0x4, scoped, tag = 'scoped memory for tpu_custom_call.1']
    #allocation5 [shape = 's32[1]{0}', space=sflag, size = 0x4, scoped, tag = 'scoped memory for tpu_custom_call.1']
    #allocation6 [shape = 'u8[2048]{0}', space=vmem, size = 0x800, scoped, tag = 'output window, operand 0, single buffered']
    %6 = vsyncpa [#allocation4], 0
    %7 = vsyncpa [#allocation5], 0
    // Predicated region
    $region2: #{tpu_custom_call.1} parent=1 // pred_check
      _
    $region3: #{tpu_custom_call.1} parent=1 // pred_check_branch
      %9 = sbr.rel (0) target = $region5
    $region4: #{tpu_custom_call.1} parent=1 // pred_region
      %s11 = ssub.s32 256, 256
      %12 = vsyncadd [#allocation4], %s11
      %s13 = sshll.u32 [#allocation3], 4
      %s14 = int_to_ptr.vmem [resolvable:$true] %s13
      %19 = dma.hbm_to_vmem [thread:$0]  %s0, 256, %s14, [#allocation4], 128, 128, 8
    $region5: #{tpu_custom_call.1} parent=1 // pred_fallthru
      _
    // Predicated region
    $region6: #{tpu_custom_call.1} parent=1 // pred_check
      _
    $region7: #{tpu_custom_call.1} parent=1 // pred_check_branch
      %21 = sbr.rel (0) target = $region9
    $region8: #{tpu_custom_call.1} parent=1 // pred_region
      %22 = dma.done [#allocation4], 256
    $region9: #{tpu_custom_call.1} parent=1 // pred_fallthru
      _
    %v24 = vld [vmem:[#allocation3] sm:$0xff]
    %v25 = vld [vmem:[#allocation3 + $0x8] sm:$0xff]
    %vm26 = vcmask 392192
    %v27 = vsel %vm26, %v24, 0.0
    %v28 = vsel %vm26, %v25, 0.0
    %v29 = vadd.f32 %v27, %v28
    %p30 = scmp.eq.s32.totalorder 0, 0
    // Predicated region
    $region10: #{tpu_custom_call.1} parent=1 // pred_check
      %p31 = pneg %p30
    $region11: #{tpu_custom_call.1} parent=1 // pred_check_branch
      %33 = sbr.rel (%p31) target = $region13
    $region12: #{tpu_custom_call.1} parent=1 // pred_region
      %34 = vst.msk [vmem:[#allocation2] sm:$0xff] %vm26, %v29
    $region13: #{tpu_custom_call.1} parent=1 // pred_fallthru
      _
    %p35 = scmp.gt.s32.totalorder 0, 0
    // Predicated region
    $region14: #{tpu_custom_call.1} parent=1 // pred_check
      %p36 = pneg %p35
    $region15: #{tpu_custom_call.1} parent=1 // pred_check_branch
      %38 = sbr.rel (%p36) target = $region17
    $region16: #{tpu_custom_call.1} parent=1 // pred_region
      %v39 = vld [vmem:[#allocation2] sm:$0xff]
      %v40 = vadd.f32 %v39, %v29
      %41 = vst.msk [vmem:[#allocation2] sm:$0xff] %vm26, %v40
    $region17: #{tpu_custom_call.1} parent=1 // pred_fallthru
      _
    // Predicated region
    $region18: #{tpu_custom_call.1} parent=1 // pred_check
      %p42 = pneg %p30
    $region19: #{tpu_custom_call.1} parent=1 // pred_check_branch
      %44 = sbr.rel (%p42) target = $region21
    $region20: #{tpu_custom_call.1} parent=1 // pred_region
      %v45 = vld [vmem:[#allocation2] sm:$0xff]
      %v46 = vmul.f32 %v45, 0.5
      %47 = vst [vmem:[#allocation6] sm:$0xf] 0
      %v48 = vpack.c.bf16 %v46, %v46
      %vm49 = vcmask 388096
      %50 = vst.msk [vmem:[#allocation6] sm:$0xf] %vm49, %v48
    $region21: #{tpu_custom_call.1} parent=1 // pred_fallthru
      _
    // Predicated region
    $region22: #{tpu_custom_call.1} parent=1 // pred_check
      _
    $region23: #{tpu_custom_call.1} parent=1 // pred_check_branch
      %52 = sbr.rel (0) target = $region25
    $region24: #{tpu_custom_call.1} parent=1 // pred_region
      %s54 = ssub.s32 64, 64
      %55 = vsyncadd [#allocation5], %s54
      %s57 = sshll.u32 [#allocation6], 4
      %s58 = int_to_ptr.vmem [resolvable:$true] %s57
      %60 = dma.vmem_to_hbm [thread:$0]  %s58, 64, %s1, [#allocation5]
    $region25: #{tpu_custom_call.1} parent=1 // pred_fallthru
      _
    // Predicated region
    $region26: #{tpu_custom_call.1} parent=1 // pred_check
      _
    $region27: #{tpu_custom_call.1} parent=1 // pred_check_branch
      %62 = sbr.rel (0) target = $region29
    $region28: #{tpu_custom_call.1} parent=1 // pred_region
      %63 = dma.done [#allocation5], 64
    $region29: #{tpu_custom_call.1} parent=1 // pred_fallthru
      _
    %64 = vsyncpa [#allocation4], 1
    %65 = vsyncpa [#allocation5], 1

</llo_original>
